<compile_context>
chip_gen: v7x
topology: tpu7x:2x2x1
jax: 0.10.0
libtpu: 0.0.40
codegen_flags: <defaults>
</compile_context>

<pallas_src>
import math
from typing import NamedTuple

import jax
import jax.numpy as jnp
from jax.experimental import pallas as pl
from jax.experimental.pallas import tpu as pltpu

_INV_SQRT2 = 1.0 / math.sqrt(2.0)


# --------------------------------------------------------------------------- #
# Hardware query / tile selection helpers
# --------------------------------------------------------------------------- #
_VMEM_CAP = None


def _vmem_capacity_bytes():
    """Physical VMEM capacity; conservative 64 MiB fallback if the query fails."""
    global _VMEM_CAP
    if _VMEM_CAP is None:
        cap = 64 * 1024 * 1024
        try:
            info = pltpu.get_tpu_info()
            v = getattr(info, "vmem_capacity_bytes", None)
            if v:
                cap = int(v)
        except Exception:
            pass
        _VMEM_CAP = cap
    return _VMEM_CAP


def _round_up(x, m):
    return (x + m - 1) // m * m


def _clamp_tm(tm, m_total):
    """Clamp an M tile: full-dim block if tm >= M, else a multiple of 8."""
    if tm >= m_total:
        return m_total
    return max(8, (tm // 8) * 8)


def _vmem_estimate(tm, ti, hidden, x_isz, c_isz, o_isz, use_scratch):
    est = 2 * tm * hidden * x_isz            # x tile (double buffered)
    est += 2 * hidden * ti * c_isz           # w1 tile
    est += 2 * ti * hidden * c_isz           # w2 tile
    est += 2 * (ti + hidden) * 4             # bias tiles
    est += 2 * tm * hidden * o_isz           # output tile
    if use_scratch:
        est += tm * hidden * 4               # f32 accumulator
    est += tm * ti * (4 + c_isz)             # live intermediate h (+ cast copy)
    return est


def _pick_tm(m_total, hidden, ti, x_isz, c_isz, o_isz, use_scratch, budget):
    for tm in (1024, 768, 512, 384, 256, 128, 64, 32, 16, 8):
        tm_eff = _clamp_tm(tm, m_total)
        if _vmem_estimate(tm_eff, ti, hidden, x_isz, c_isz, o_isz,
                          use_scratch) <= budget:
            return tm_eff
    return _clamp_tm(8, m_total)


# --------------------------------------------------------------------------- #
# Parameters (prepare ONCE at model init: cast + pad weights, no per-call pass)
# --------------------------------------------------------------------------- #
class FFNParams(NamedTuple):
    w1: jax.Array          # (hidden, I_pad)  compute dtype
    b1: jax.Array          # (1, I_pad)       f32
    w2: jax.Array          # (I_pad, hidden)  compute dtype
    b2: jax.Array          # (1, hidden)      f32
    ti: int                # intermediate tile (I_pad % ti == 0)
    intermediate: int      # un-padded intermediate size


def prepare_params(w1, b1, w2, b2, *, compute_dtype=jnp.bfloat16, ti=None):
    """w1: [hidden, I], b1: [I], w2: [I, hidden], b2: [hidden]."""
    hidden, intermediate = w1.shape
    if ti is None:
        ti = 1024 if _vmem_capacity_bytes() >= (96 << 20) else 512
    ti_eff = min(int(ti), _round_up(intermediate, 128))
    i_pad = _round_up(intermediate, ti_eff)
    if i_pad != intermediate:
        # Zero-padded intermediate units contribute exactly 0:
        # gelu(x @ 0 + 0) = 0 and 0 @ w2_pad_rows = 0.
        w1 = jnp.pad(w1, ((0, 0), (0, i_pad - intermediate)))
        b1 = jnp.pad(b1, ((0, i_pad - intermediate),))
        w2 = jnp.pad(w2, ((0, i_pad - intermediate), (0, 0)))
    return FFNParams(
        w1=w1.astype(compute_dtype),
        b1=b1.reshape(1, i_pad).astype(jnp.float32),
        w2=w2.astype(compute_dtype),
        b2=b2.reshape(1, hidden).astype(jnp.float32),
        ti=ti_eff,
        intermediate=int(intermediate),
    )


# --------------------------------------------------------------------------- #
# Kernel
# --------------------------------------------------------------------------- #
def _make_kernel(compute_dtype, acc_in_output):
    def body(x_ref, w1_ref, b1_ref, w2_ref, b2_ref, o_ref, acc_ref):
        k = pl.program_id(1)

        @pl.when(k == 0)
        def _init():
            # Initialize the accumulator with bias2 -> no separate finalize add.
            acc_ref[...] = jnp.broadcast_to(
                b2_ref[...], acc_ref.shape).astype(acc_ref.dtype)

        x = x_ref[...].astype(compute_dtype)              # on-chip cast (no HBM copy)
        h = jnp.dot(x, w1_ref[...], preferred_element_type=jnp.float32)
        h = h + b1_ref[...]
        # Exact (erf) GELU -- matches nn.GELU(approximate='none') default.
        h = 0.5 * h * (1.0 + jax.lax.erf(h * _INV_SQRT2))
        acc_ref[...] += jnp.dot(
            h.astype(compute_dtype), w2_ref[...],
            preferred_element_type=jnp.float32).astype(acc_ref.dtype)

        if not acc_in_output:
            @pl.when(k == pl.num_programs(1) - 1)
            def _finalize():
                o_ref[...] = acc_ref[...].astype(o_ref.dtype)

    if acc_in_output:
        def kernel(x_ref, w1_ref, b1_ref, w2_ref, b2_ref, o_ref):
            body(x_ref, w1_ref, b1_ref, w2_ref, b2_ref, o_ref, o_ref)
    else:
        def kernel(x_ref, w1_ref, b1_ref, w2_ref, b2_ref, o_ref, acc_ref):
            body(x_ref, w1_ref, b1_ref, w2_ref, b2_ref, o_ref, acc_ref)
    return kernel


# --------------------------------------------------------------------------- #
# Wrapper
# --------------------------------------------------------------------------- #
def feed_forward(x, params: FFNParams, *, tm=None):
    """x: [..., hidden]; params from prepare_params()."""
    *lead, hidden = x.shape
    assert hidden == params.w1.shape[0], "hidden size mismatch"
    m_total = int(math.prod(lead)) if lead else 1
    out_dtype = x.dtype
    compute_dtype = params.w1.dtype
    ti = params.ti
    i_pad = params.w1.shape[1]

    acc_in_output = (out_dtype == jnp.float32)   # accumulate directly in o_ref
    use_scratch = not acc_in_output

    x_isz = jnp.dtype(x.dtype).itemsize
    c_isz = jnp.dtype(compute_dtype).itemsize
    o_isz = jnp.dtype(out_dtype).itemsize

    vmem_cap = _vmem_capacity_bytes()
    budget = max(24 << 20, min(vmem_cap - (12 << 20), 110 << 20))

    if tm is None:
        tm_eff = _pick_tm(m_total, hidden, ti, x_isz, c_isz, o_isz,
                          use_scratch, budget)
        # Megacore guard (v7x-like 64-MiB parts have 2 TensorCores): keep >= 2
        # M blocks so the "parallel" axis feeds both cores.
        if vmem_cap <= (72 << 20) and m_total >= 512 and pl.cdiv(m_total, tm_eff) < 2:
            tm_eff = _clamp_tm(_round_up(pl.cdiv(m_total, 2), 128), m_total)
    else:
        tm_eff = _clamp_tm(int(tm), m_total)

    grid = (pl.cdiv(m_total, tm_eff), i_pad // ti)

    est = _vmem_estimate(tm_eff, ti, hidden, x_isz, c_isz, o_isz, use_scratch)
    vmem_limit = int(max(32 << 20,
                         min(est + (16 << 20), vmem_cap - (8 << 20), 112 << 20)))

    m_blocks = grid[0]
    cost = pl.CostEstimate(
        flops=int(4 * m_total * hidden * params.intermediate),
        transcendentals=int(m_total * params.intermediate),
        bytes_accessed=int(
            m_total * hidden * x_isz
            + m_blocks * (params.w1.size * c_isz + params.w2.size * c_isz)
            + params.b1.size * 4 + params.b2.size * 4
            + m_total * hidden * o_isz
        ),
    )

    kernel = _make_kernel(compute_dtype, acc_in_output)
    scratch = [] if acc_in_output else [pltpu.VMEM((tm_eff, hidden), jnp.float32)]

    x2 = x.reshape(m_total, hidden)   # metadata-only reshape, no HBM copy

    out = pl.pallas_call(
        kernel,
        out_shape=jax.ShapeDtypeStruct((m_total, hidden), out_dtype),
        grid_spec=pltpu.PrefetchScalarGridSpec(
            num_scalar_prefetch=0,
            grid=grid,
            in_specs=[
                pl.BlockSpec((tm_eff, hidden), lambda i, k: (i, 0)),   # x
                pl.BlockSpec((hidden, ti), lambda i, k: (0, k)),       # w1
                pl.BlockSpec((1, ti), lambda i, k: (0, k)),            # b1
                pl.BlockSpec((ti, hidden), lambda i, k: (k, 0)),       # w2
                pl.BlockSpec((1, hidden), lambda i, k: (0, 0)),        # b2
            ],
            out_specs=pl.BlockSpec((tm_eff, hidden), lambda i, k: (i, 0)),
            scratch_shapes=scratch,
        ),
        compiler_params=pltpu.CompilerParams(
            dimension_semantics=("parallel", "arbitrary"),
            vmem_limit_bytes=vmem_limit,
        ),
        cost_estimate=cost,
    )(x2, params.w1, params.b1, params.w2, params.b2)

    return out.reshape(x.shape)


# --------------------------------------------------------------------------- #
# Reference + test harness
# --------------------------------------------------------------------------- #
def _reference(x, w1, b1, w2, b2):
    h = jnp.einsum("bsh,hi->bsi", x, w1) + b1
    h = 0.5 * h * (1.0 + jax.lax.erf(h * _INV_SQRT2))
    return jnp.einsum("bsi,ih->bsh", h, w2) + b2


def _make_raw_params(key, hidden, intermediate):
    kw1, kb1, kw2, kb2 = jax.random.split(key, 4)
    lim1 = 1.0 / math.sqrt(hidden)
    lim2 = 1.0 / math.sqrt(intermediate)
    w1 = jax.random.uniform(kw1, (hidden, intermediate), jnp.float32, -lim1, lim1)
    b1 = jax.random.uniform(kb1, (intermediate,), jnp.float32, -lim1, lim1)
    w2 = jax.random.uniform(kw2, (intermediate, hidden), jnp.float32, -lim2, lim2)
    b2 = jax.random.uniform(kb2, (hidden,), jnp.float32, -lim2, lim2)
    return w1, b1, w2, b2


if __name__ == "__main__":
    key = jax.random.PRNGKey(0)

    # --- Test 1: module-sized toy shapes (single tile in both grid axes). ---
    batch, seq, hidden, intermediate = 2, 8, 32, 128
    k1, k2, key = jax.random.split(key, 3)
    x = jax.random.normal(k1, (batch, seq, hidden), dtype=jnp.float32)
    w1, b1, w2, b2 = _make_raw_params(k2, hidden, intermediate)
    ref = _reference(x, w1, b1, w2, b2)

    p_f32 = prepare_params(w1, b1, w2, b2, compute_dtype=jnp.float32)
    out_f32 = jax.block_until_ready(feed_forward(x, p_f32))
    assert out_f32.shape == (batch, seq, hidden)
    assert jnp.allclose(out_f32, ref, atol=1e-4, rtol=1e-4)

    p_bf16 = prepare_params(w1, b1, w2, b2, compute_dtype=jnp.bfloat16)
    out_bf = jax.block_until_ready(feed_forward(x, p_bf16))
    assert jnp.allclose(out_bf, ref, atol=3e-2, rtol=3e-2)

    # --- Test 2: partial last M block + multi-step k accumulation (f32,
    #             direct accumulation into the output block). ---
    batch2, seq2, hidden2, intermediate2 = 2, 50, 128, 384
    k3, k4 = jax.random.split(key, 2)
    x2 = jax.random.normal(k3, (batch2, seq2, hidden2), dtype=jnp.float32)
    w1b, b1b, w2b, b2b = _make_raw_params(k4, hidden2, intermediate2)
    ref2 = _reference(x2, w1b, b1b, w2b, b2b)

    p2_f32 = prepare_params(w1b, b1b, w2b, b2b, compute_dtype=jnp.float32, ti=128)
    out2 = jax.block_until_ready(feed_forward(x2, p2_f32, tm=64))
    assert out2.shape == (batch2, seq2, hidden2)
    assert jnp.allclose(out2, ref2, atol=1e-4, rtol=1e-4)

    # --- Test 3: bf16 activations / bf16 output -> f32 scratch accumulator path. ---
    x2_bf = x2.astype(jnp.bfloat16)
    p2_bf16 = prepare_params(w1b, b1b, w2b, b2b, compute_dtype=jnp.bfloat16, ti=128)
    out3 = jax.block_until_ready(feed_forward(x2_bf, p2_bf16, tm=64))
    ref3 = _reference(x2_bf.astype(jnp.float32), w1b, b1b, w2b, b2b)
    assert out3.dtype == jnp.bfloat16
    assert jnp.allclose(out3.astype(jnp.float32), ref3, atol=5e-2, rtol=5e-2)

    print("KERNEL_OK")
</pallas_src>

<mosaic_0001>
module attributes {stable_mosaic.version = 11 : i64} {
  func.func @kernel(%arg0: i32, %arg1: i32, %arg2: memref<16x32xf32, #tpu.memory_space<vmem>>, %arg3: memref<32x128xf32, #tpu.memory_space<vmem>>, %arg4: memref<1x128xf32, #tpu.memory_space<vmem>>, %arg5: memref<128x32xf32, #tpu.memory_space<vmem>>, %arg6: memref<1x32xf32, #tpu.memory_space<vmem>>, %arg7: memref<16x32xf32, #tpu.memory_space<vmem>>) attributes {dimension_semantics = [#tpu.dimension_semantics<parallel>, #tpu.dimension_semantics<arbitrary>], iteration_bounds = array<i64: 1, 1>, scalar_prefetch = 0 : i64, scratch_operands = 0 : i64, tpu.core_type = #tpu.core_type<tc>, window_params = [{transform_indices = @transform_0, window_bounds = array<i64: 16, 32>}, {transform_indices = @transform_1, window_bounds = array<i64: 32, 128>}, {transform_indices = @transform_2, window_bounds = array<i64: 1, 128>}, {transform_indices = @transform_3, window_bounds = array<i64: 128, 32>}, {pipeline_mode = #tpu.pipeline_mode<synchronous>, transform_indices = @transform_4, window_bounds = array<i64: 1, 32>}, {transform_indices = @transform_5, window_bounds = array<i64: 16, 32>}]} {
    %c0_i32 = arith.constant 0 : i32
    %0 = arith.cmpi eq, %arg1, %c0_i32 : i32
    %1 = arith.extui %0 : i1 to i32
    %c0_i32_0 = arith.constant 0 : i32
    %2 = arith.cmpi ne, %1, %c0_i32_0 : i32
    scf.if %2 {
      %c0_16 = arith.constant 0 : index
      %c0_17 = arith.constant 0 : index
      %22 = vector.load %arg6[%c0_16, %c0_17] : memref<1x32xf32, #tpu.memory_space<vmem>>, vector<1x32xf32>
      %23 = vector.shape_cast %22 : vector<1x32xf32> to vector<1x32xf32>
      %24 = vector.broadcast %23 : vector<1x32xf32> to vector<16x32xf32>
      %c0_18 = arith.constant 0 : index
      %c0_19 = arith.constant 0 : index
      %25 = vector.load %arg7[%c0_18, %c0_19] : memref<16x32xf32, #tpu.memory_space<vmem>>, vector<16x32xf32>
      tpu.vector_store %arg7[%c0_18, %c0_19], %24 {strides = array<i32>} : memref<16x32xf32, #tpu.memory_space<vmem>>, vector<16x32xf32>,
    } else {
    }
    %c0 = arith.constant 0 : index
    %c0_1 = arith.constant 0 : index
    %3 = vector.load %arg2[%c0, %c0_1] : memref<16x32xf32, #tpu.memory_space<vmem>>, vector<16x32xf32>
    %c0_2 = arith.constant 0 : index
    %c0_3 = arith.constant 0 : index
    %4 = vector.load %arg3[%c0_2, %c0_3] : memref<32x128xf32, #tpu.memory_space<vmem>>, vector<32x128xf32>
    %cst = arith.constant dense<0.000000e+00> : vector<16x128xf32>
    %5 = tpu.matmul %3, %4, %cst {dimension_numbers = #tpu.dot_dimension_numbers<[1], [0], [0], [1], [0, 0, 1, 1], [], []>} : vector<16x32xf32>, vector<32x128xf32>, vector<16x128xf32> -> vector<16x128xf32>
    %c0_4 = arith.constant 0 : index
    %c0_5 = arith.constant 0 : index
    %6 = vector.load %arg4[%c0_4, %c0_5] : memref<1x128xf32, #tpu.memory_space<vmem>>, vector<1x128xf32>
    %7 = vector.broadcast %6 : vector<1x128xf32> to vector<16x128xf32>
    %8 = arith.addf %5, %7 : vector<16x128xf32>
    %cst_6 = arith.constant 5.000000e-01 : f32
    %9 = vector.broadcast %cst_6 : f32 to vector<16x128xf32>
    %10 = arith.mulf %9, %8 : vector<16x128xf32>
    %cst_7 = arith.constant 0.707106769 : f32
    %11 = vector.broadcast %cst_7 : f32 to vector<16x128xf32>
    %12 = arith.mulf %8, %11 : vector<16x128xf32>
    %13 = math.erf %12 : vector<16x128xf32>
    %cst_8 = arith.constant 1.000000e+00 : f32
    %14 = vector.broadcast %cst_8 : f32 to vector<16x128xf32>
    %15 = arith.addf %14, %13 : vector<16x128xf32>
    %16 = arith.mulf %10, %15 : vector<16x128xf32>
    %c0_9 = arith.constant 0 : index
    %c0_10 = arith.constant 0 : index
    %17 = vector.load %arg7[%c0_9, %c0_10] : memref<16x32xf32, #tpu.memory_space<vmem>>, vector<16x32xf32>
    %c0_11 = arith.constant 0 : index
    %c0_12 = arith.constant 0 : index
    %18 = vector.load %arg5[%c0_11, %c0_12] : memref<128x32xf32, #tpu.memory_space<vmem>>, vector<128x32xf32>
    %cst_13 = arith.constant dense<0.000000e+00> : vector<16x32xf32>
    %19 = tpu.matmul %16, %18, %cst_13 {dimension_numbers = #tpu.dot_dimension_numbers<[1], [0], [0], [1], [0, 0, 1, 1], [], []>} : vector<16x128xf32>, vector<128x32xf32>, vector<16x32xf32> -> vector<16x32xf32>
    %20 = arith.addf %17, %19 : vector<16x32xf32>
    %c0_14 = arith.constant 0 : index
    %c0_15 = arith.constant 0 : index
    %21 = vector.load %arg7[%c0_14, %c0_15] : memref<16x32xf32, #tpu.memory_space<vmem>>, vector<16x32xf32>
    tpu.vector_store %arg7[%c0_14, %c0_15], %20 {strides = array<i32>} : memref<16x32xf32, #tpu.memory_space<vmem>>, vector<16x32xf32>,
    return
  }
  func.func @transform_0(%arg0: i32, %arg1: i32) -> (i32, i32) {
    %c0_i32 = arith.constant 0 : i32
    %c0_i32_0 = arith.constant 0 : i32
    return %arg0, %c0_i32 : i32, i32
  }
  func.func @transform_1(%arg0: i32, %arg1: i32) -> (i32, i32) {
    %c0_i32 = arith.constant 0 : i32
    %c0_i32_0 = arith.constant 0 : i32
    return %c0_i32, %arg1 : i32, i32
  }
  func.func @transform_2(%arg0: i32, %arg1: i32) -> (i32, i32) {
    %c0_i32 = arith.constant 0 : i32
    %c0_i32_0 = arith.constant 0 : i32
    return %c0_i32, %arg1 : i32, i32
  }
  func.func @transform_3(%arg0: i32, %arg1: i32) -> (i32, i32) {
    %c0_i32 = arith.constant 0 : i32
    %c0_i32_0 = arith.constant 0 : i32
    return %arg1, %c0_i32 : i32, i32
  }
  func.func @transform_4(%arg0: i32, %arg1: i32) -> (i32, i32) {
    %c0_i32 = arith.constant 0 : i32
    %c0_i32_0 = arith.constant 0 : i32
    %c0_i32_1 = arith.constant 0 : i32
    return %c0_i32, %c0_i32_0 : i32, i32
  }
  func.func @transform_5(%arg0: i32, %arg1: i32) -> (i32, i32) {
    %c0_i32 = arith.constant 0 : i32
    %c0_i32_0 = arith.constant 0 : i32
    return %arg0, %c0_i32 : i32, i32
  }
}

</mosaic_0001>

<llo_original>
// kernel: tpu_custom_call.1
$region0: #{tpu_custom_call.1}
  #allocation0 [shape = 'u32[]', space=smem, size = 0x4, offset = 0x4, fixed_abs, tag = 'smem constant byte address 0x4 - core index']
  #allocation1 [shape = 'u32[144,128]{1,0:T(1,128)}', space=vmem, size = 0x12000, scoped, tag = 'internal scratch']
  %s0 = inlined_call_operand.vmem [shape: f32[16,32], index: 0, kind: input, shape index: {}]
  %s1 = inlined_call_operand.vmem [shape: f32[32,128], index: 1, kind: input, shape index: {}]
  %s2 = inlined_call_operand.vmem [shape: f32[1,128], index: 2, kind: input, shape index: {}]
  %s3 = inlined_call_operand.vmem [shape: f32[128,32], index: 3, kind: input, shape index: {}]
  %s4 = inlined_call_operand.vmem [shape: f32[1,32], index: 4, kind: input, shape index: {}]
  %s5 = inlined_call_operand.hbm [shape: f32[16,32], index: 5, kind: output, shape index: {}]
  %s6 = sld [smem:[#allocation0]]
  $region34: #{tpu_custom_call.1} parent=0
    _
  %s8 = ssub.s32 1, %s6
  %s9 = scalar_select 0, %s8, %s6
  $region1: #{tpu_custom_call.1} parent=0
    #allocation2 [shape = 'u8[8192]{0}', space=vmem, size = 0x2000, scoped, tag = 'output window, operand 0, single buffered']
    #allocation3 [shape = 's32[1]{0}', space=sflag, size = 0x4, scoped, tag = 'scoped memory for tpu_custom_call.1']
    %10 = vsyncpa [#allocation3], 0
    // Predicated region
    $region2: #{tpu_custom_call.1} parent=1 // pred_check
      _
    $region3: #{tpu_custom_call.1} parent=1 // pred_check_branch
      %12 = sbr.rel (0) target = $region5
    $region4: #{tpu_custom_call.1} parent=1 // pred_region
      _
    $region5: #{tpu_custom_call.1} parent=1 // pred_fallthru
      _
    // Predicated region
    $region6: #{tpu_custom_call.1} parent=1 // pred_check
      _
    $region7: #{tpu_custom_call.1} parent=1 // pred_check_branch
      %14 = sbr.rel (0) target = $region9
    $region8: #{tpu_custom_call.1} parent=1 // pred_region
      _
    $region9: #{tpu_custom_call.1} parent=1 // pred_fallthru
      _
    // Predicated region
    $region10: #{tpu_custom_call.1} parent=1 // pred_check
      _
    $region11: #{tpu_custom_call.1} parent=1 // pred_check_branch
      %16 = sbr.rel (0) target = $region13
    $region12: #{tpu_custom_call.1} parent=1 // pred_region
      _
    $region13: #{tpu_custom_call.1} parent=1 // pred_fallthru
      _
    // Predicated region
    $region14: #{tpu_custom_call.1} parent=1 // pred_check
      _
    $region15: #{tpu_custom_call.1} parent=1 // pred_check_branch
      %18 = sbr.rel (0) target = $region17
    $region16: #{tpu_custom_call.1} parent=1 // pred_region
      _
    $region17: #{tpu_custom_call.1} parent=1 // pred_fallthru
      _
    // Predicated region
    $region18: #{tpu_custom_call.1} parent=1 // pred_check
      _
    $region19: #{tpu_custom_call.1} parent=1 // pred_check_branch
      %20 = sbr.rel (0) target = $region21
    $region20: #{tpu_custom_call.1} parent=1 // pred_region
      _
    $region21: #{tpu_custom_call.1} parent=1 // pred_fallthru
      _
    %p21 = scmp.eq.s32.totalorder 0, 0
    // Predicated region
    $region22: #{tpu_custom_call.1} parent=1 // pred_check
      %p22 = pneg %p21
    $region23: #{tpu_custom_call.1} parent=1 // pred_check_branch
      %24 = sbr.rel (%p22) target = $region25
    $region24: #{tpu_custom_call.1} parent=1 // pred_region
      %v25 = vld [vmem:[%s4] sm:$0x1]
      %v27 = vlaneseq
      %v28 = vshrl.u32 %v27, 7
      %v29 = vsub.s32 0, %v28
      %v30 = vrot.slane %v25, %v29
      %vm32 = vcmask 261120
      %33 = vst.msk [vmem:[#allocation2] sm:$0xff] %vm32, %v30
      %34 = vst.msk [vmem:[#allocation2 + $0x8] sm:$0xff] %vm32, %v30
    $region25: #{tpu_custom_call.1} parent=1 // pred_fallthru
      _
    %v35 = vld [vmem:[%s0] sm:$0xff]
    %v36 = vld [vmem:[%s0 + $0x8] sm:$0xff]
    %v37 = vld [vmem:[%s1] sm:$0xff]
    %v38 = vld [vmem:[%s1 + $0x8] sm:$0xff]
    %v39 = vld [vmem:[%s1 + $0x10] sm:$0xff]
    %v40 = vld [vmem:[%s1 + $0x18] sm:$0xff]
    %v41 = vld [vmem:[%s2] sm:$0x1]
    %v43 = vlaneseq
    %v44 = vshrl.u32 %v43, 7
    %v45 = vsub.s32 0, %v44
    %v46 = vrot.slane %v41, %v45
    %vm48 = vcmask 261120
    %v50 = vsel %vm48, %v35, 0
    %v53 = vsel %vm48, %v36, 0
    %55 = vmatprep.subr.mxu0 0.0
    %56 = vmatpush1.msra.mxu0 %v37
    %57 = vmatprep.subr.mxu0 0.0
    %58 = vmatpush1.msra.mxu0 %v38
    %59 = vmatprep.subr.mxu0 0.0
    %60 = vmatpush1.msra.mxu0 %v39
    %61 = vmatprep.subr.mxu0 0.0
    %62 = vmatpush1.msra.mxu0 %v40
    %63 = vmatprep.subr.mxu0 0.0
    %64 = vmatpush1.msra.mxu0 0.0
    %65 = vmatprep.subr.mxu0 0.0
    %66 = vmatpush1.msra.mxu0 0.0
    %67 = vmatprep.subr.mxu0 0.0
    %68 = vmatpush1.msra.mxu0 0.0
    %69 = vmatprep.subr.mxu0 0.0
    %70 = vmatpush1.msra.mxu0 0.0
    %71 = vmatprep.subr.mxu0 0.0
    %72 = vmatpush1.msra.mxu0 0.0
    %73 = vmatprep.subr.mxu0 0.0
    %74 = vmatpush1.msra.mxu0 0.0
    %75 = vmatprep.subr.mxu0 0.0
    %76 = vmatpush1.msra.mxu0 0.0
    %77 = vmatprep.subr.mxu0 0.0
    %78 = vmatpush1.msra.mxu0 0.0
    %79 = vmatprep.subr.mxu0 0.0
    %80 = vmatpush1.msra.mxu0 0.0
    %81 = vmatprep.subr.mxu0 0.0
    %82 = vmatpush1.msra.mxu0 0.0
    %83 = vmatprep.subr.mxu0 0.0
    %84 = vmatpush1.msra.mxu0 0.0
    %85 = vmatprep.subr.mxu0 0.0
    %86 = vmatpush1.msra.mxu0 0.0
    %87 = vmatprep.subr.mxu0 0.0
    %88 = vmatpush1.msra.mxu0 0.0
    %89 = vmatprep.subr.mxu0 0.0
    %90 = vmatpush1.msra.mxu0 0.0
    %91 = vmatprep.subr.mxu0 0.0
    %92 = vmatpush1.msra.mxu0 0.0
    %93 = vmatprep.subr.mxu0 0.0
    %94 = vmatpush1.msra.mxu0 0.0
    %95 = vmatprep.subr.mxu0 0.0
    %96 = vmatpush1.msra.mxu0 0.0
    %97 = vmatprep.subr.mxu0 0.0
    %98 = vmatpush1.msra.mxu0 0.0
    %99 = vmatprep.subr.mxu0 0.0
    %100 = vmatpush1.msra.mxu0 0.0
    %101 = vmatprep.subr.mxu0 0.0
    %102 = vmatpush1.msra.mxu0 0.0
    %103 = vmatprep.subr.mxu0 0.0
    %104 = vmatpush1.msra.mxu0 0.0
    %105 = vmatprep.subr.mxu0 0.0
    %106 = vmatpush1.msra.mxu0 0.0
    %107 = vmatprep.subr.mxu0 0.0
    %108 = vmatpush1.msra.mxu0 0.0
    %109 = vmatprep.subr.mxu0 0.0
    %110 = vmatpush1.msra.mxu0 0.0
    %111 = vmatprep.subr.mxu0 0.0
    %112 = vmatpush1.msra.mxu0 0.0
    %113 = vmatprep.subr.mxu0 0.0
    %114 = vmatpush1.msra.mxu0 0.0
    %115 = vmatprep.subr.mxu0 0.0
    %116 = vmatpush1.msra.mxu0 0.0
    %117 = vmatprep.subr.mxu0 0.0
    %118 = vmatpush1.msra.mxu0 0.0
    %119 = vmatprep.mubr.f32.mxu0 0.0
    %120 = vmatmul.mubr.f32.gmra.mrb[0].mxu0 %v50
    %v121 = vpop.f32.mrb[0].mxu0
    %v122 = vadd.f32 %v46, %v121
    %v123 = vpop.f32.mrb[0].mxu0
    %124 = vmatprep.mubr.f32.mxu0 0.0
    %125 = vmatmul.mubr.f32.gmra.mrb[0].mxu0 %v53
    %v126 = vpop.f32.mrb[0].mxu0
    %v127 = vadd.f32 %v46, %v126
    %v128 = vpop.f32.mrb[0].mxu0
    %129 = vdwg.mxu0
    %v130 = vmul.f32 %v122, 0.5
    %v131 = vmul.f32 %v127, 0.5
    %v132 = vmul.f32 %v122, 0.70710677
    %v133 = vmul.f32 %v127, 0.70710677
    %v134 = verf.f32.pop %v132
    %v135 = verf.f32.pop %v133
    %v136 = vadd.f32 %v134, 1.0
    %v137 = vadd.f32 %v135, 1.0
    %v138 = vmul.f32 %v130, %v136
    %v139 = vmul.f32 %v131, %v137
    %v140 = vld [vmem:[#allocation2] sm:$0xff]
    %v141 = vld [vmem:[#allocation2 + $0x8] sm:$0xff]
    %v142 = vld [vmem:[%s3] sm:$0xff]
    %v143 = vld [vmem:[%s3 + $0x8] sm:$0xff]
    %v144 = vld [vmem:[%s3 + $0x10] sm:$0xff]
    %v145 = vld [vmem:[%s3 + $0x18] sm:$0xff]
    %v146 = vld [vmem:[%s3 + $0x20] sm:$0xff]
    %v147 = vld [vmem:[%s3 + $0x28] sm:$0xff]
    %v148 = vld [vmem:[%s3 + $0x30] sm:$0xff]
    %v149 = vld [vmem:[%s3 + $0x38] sm:$0xff]
    %v150 = vld [vmem:[%s3 + $0x40] sm:$0xff]
    %v151 = vld [vmem:[%s3 + $0x48] sm:$0xff]
    %v152 = vld [vmem:[%s3 + $0x50] sm:$0xff]
    %v153 = vld [vmem:[%s3 + $0x58] sm:$0xff]
    %v154 = vld [vmem:[%s3 + $0x60] sm:$0xff]
    %v155 = vld [vmem:[%s3 + $0x68] sm:$0xff]
    %v156 = vld [vmem:[%s3 + $0x70] sm:$0xff]
    %v157 = vld [vmem:[%s3 + $0x78] sm:$0xff]
    %158 = vmatprep.subr.mxu0 0.0
    %159 = vmatpush1.msra.mxu0 %v142
    %160 = vmatprep.subr.mxu0 0.0
    %161 = vmatpush1.msra.mxu0 %v143
    %162 = vmatprep.subr.mxu0 0.0
    %163 = vmatpush1.msra.mxu0 %v144
    %164 = vmatprep.subr.mxu0 0.0
    %165 = vmatpush1.msra.mxu0 %v145
    %166 = vmatprep.subr.mxu0 0.0
    %167 = vmatpush1.msra.mxu0 %v146
    %168 = vmatprep.subr.mxu0 0.0
    %169 = vmatpush1.msra.mxu0 %v147
    %170 = vmatprep.subr.mxu0 0.0
    %171 = vmatpush1.msra.mxu0 %v148
    %172 = vmatprep.subr.mxu0 0.0
    %173 = vmatpush1.msra.mxu0 %v149
    %174 = vmatprep.subr.mxu0 0.0
    %175 = vmatpush1.msra.mxu0 %v150
    %176 = vmatprep.subr.mxu0 0.0
    %177 = vmatpush1.msra.mxu0 %v151
    %178 = vmatprep.subr.mxu0 0.0
    %179 = vmatpush1.msra.mxu0 %v152
    %180 = vmatprep.subr.mxu0 0.0
    %181 = vmatpush1.msra.mxu0 %v153
    %182 = vmatprep.subr.mxu0 0.0
    %183 = vmatpush1.msra.mxu0 %v154
    %184 = vmatprep.subr.mxu0 0.0
    %185 = vmatpush1.msra.mxu0 %v155
    %186 = vmatprep.subr.mxu0 0.0
    %187 = vmatpush1.msra.mxu0 %v156
    %188 = vmatprep.subr.mxu0 0.0
    %189 = vmatpush1.msra.mxu0 %v157
    %190 = vmatprep.subr.mxu0 0.0
    %191 = vmatpush1.msra.mxu0 0.0
    %192 = vmatprep.subr.mxu0 0.0
    %193 = vmatpush1.msra.mxu0 0.0
    %194 = vmatprep.subr.mxu0 0.0
    %195 = vmatpush1.msra.mxu0 0.0
    %196 = vmatprep.subr.mxu0 0.0
    %197 = vmatpush1.msra.mxu0 0.0
    %198 = vmatprep.subr.mxu0 0.0
    %199 = vmatpush1.msra.mxu0 0.0
    %200 = vmatprep.subr.mxu0 0.0
    %201 = vmatpush1.msra.mxu0 0.0
    %202 = vmatprep.subr.mxu0 0.0
    %203 = vmatpush1.msra.mxu0 0.0
    %204 = vmatprep.subr.mxu0 0.0
    %205 = vmatpush1.msra.mxu0 0.0
    %206 = vmatprep.subr.mxu0 0.0
    %207 = vmatpush1.msra.mxu0 0.0
    %208 = vmatprep.subr.mxu0 0.0
    %209 = vmatpush1.msra.mxu0 0.0
    %210 = vmatprep.subr.mxu0 0.0
    %211 = vmatpush1.msra.mxu0 0.0
    %212 = vmatprep.subr.mxu0 0.0
    %213 = vmatpush1.msra.mxu0 0.0
    %214 = vmatprep.subr.mxu0 0.0
    %215 = vmatpush1.msra.mxu0 0.0
    %216 = vmatprep.subr.mxu0 0.0
    %217 = vmatpush1.msra.mxu0 0.0
    %218 = vmatprep.subr.mxu0 0.0
    %219 = vmatpush1.msra.mxu0 0.0
    %220 = vmatprep.subr.mxu0 0.0
    %221 = vmatpush1.msra.mxu0 0.0
    %222 = vmatprep.mubr.f32.mxu0 0.0
    %223 = vmatmul.mubr.f32.gmra.mrb[0].mxu0 %v138
    %v224 = vpop.f32.mrb[0].mxu0
    %v225 = vadd.f32 0.0, %v224
    %v226 = vpop.f32.mrb[0].mxu0
    %227 = vmatprep.mubr.f32.mxu0 0.0
    %228 = vmatmul.mubr.f32.gmra.mrb[0].mxu0 %v139
    %v229 = vpop.f32.mrb[0].mxu0
    %v230 = vadd.f32 0.0, %v229
    %v231 = vpop.f32.mrb[0].mxu0
    %232 = vdwg.mxu0
    %v233 = vadd.f32 %v140, %v225
    %v234 = vadd.f32 %v141, %v230
    %235 = vst.msk [vmem:[#allocation2] sm:$0xff] %vm48, %v233
    %236 = vst.msk [vmem:[#allocation2 + $0x8] sm:$0xff] %vm48, %v234
    // Predicated region
    $region26: #{tpu_custom_call.1} parent=1 // pred_check
      _
    $region27: #{tpu_custom_call.1} parent=1 // pred_check_branch
      %238 = sbr.rel (0) target = $region29
    $region28: #{tpu_custom_call.1} parent=1 // pred_region
      %s240 = ssub.s32 256, 256
      %241 = vsyncadd [#allocation3], %s240
      %s242 = sshll.u32 [#allocation2], 4
      %s243 = int_to_ptr.vmem [resolvable:$true] %s242
      %248 = dma.vmem_to_hbm [thread:$0]  %s243, 256, %s5, [#allocation3], 128, 128, 8
    $region29: #{tpu_custom_call.1} parent=1 // pred_fallthru
      _
    // Predicated region
    $region30: #{tpu_custom_call.1} parent=1 // pred_check
      _
    $region31: #{tpu_custom_call.1} parent=1 // pred_check_branch
      %250 = sbr.rel (0) target = $region33
    $region32: #{tpu_custom_call.1} parent=1 // pred_region
      %251 = dma.done [#allocation3], 256
    $region33: #{tpu_custom_call.1} parent=1 // pred_fallthru
      _
    %252 = vsyncpa [#allocation3], 1

</llo_original>
